<compile_context>
chip_gen: v7x
topology: tpu7x:2x2x1
jax: 0.10.0
libtpu: 0.0.40
codegen_flags: <defaults>
</compile_context>

<pallas_src>
import numpy as np
import jax
import jax.numpy as jnp
from jax.experimental import pallas as pl
from jax.experimental.pallas import tpu as pltpu


def cnn_forward(x, w1, b1, w2, b2, wfc, bfc, tile_b=None, mxu_dtype=jnp.bfloat16):
    """Forward pass of CNNModel.

    x:   (B, L) f32            -- L == input_channels of the module
    w1:  (C1, 1, 3)            -- torch Conv1d weight layout (Cout, Cin, K)
    b1:  (C1,)
    w2:  (C2, C1, 3)
    b2:  (C2,)
    wfc: (NC, C2 * L//4)       -- torch Linear weight layout
    bfc: (NC,)
    """
    f32 = jnp.float32
    B, L = x.shape
    C1 = w1.shape[0]
    C2 = w2.shape[0]
    NC = wfc.shape[0]
    L2, L4 = L // 2, L // 4
    C1P = 128                       # conv1 channels padded to a full lane tile
    NCP = 128                       # class dim padded to a full lane tile (lane-dense out)
    assert L % 4 == 0 and wfc.shape[1] == C2 * L4

    TB = B if tile_b is None else tile_b
    assert B % TB == 0 and TB % 8 == 0, "batch tile must divide B and be a multiple of 8"
    N2 = TB * L2                    # rows per tile, pooled-position-major: row = l2*TB + b

    def kernel(x_ref, w1_ref, b1_ref, w2_ref, b2_ref, wfc_ref, bfc_ref, o_ref):
        xv = x_ref[...]                                       # (N2, 2): even / odd position
        xe = xv[:, 0:1]                                       # x[b, 2*l2]
        xo = xv[:, 1:2]                                       # x[b, 2*l2 + 1]
        # neighbours across pooled positions: 8-aligned slab shift via slice + concat
        zcol = jnp.zeros((TB, 1), f32)
        xm = jnp.concatenate([zcol, xo[: N2 - TB, :]], axis=0)    # x[b, 2*l2 - 1] (0 at l2=0)
        xp = jnp.concatenate([xe[TB:, :], zcol], axis=0)          # x[b, 2*l2 + 2] (0 at end)

        # ---- conv1 (Cin=1 -> rank-1 VPU FMAs) + ReLU + MaxPool(2,2), all in-register ----
        w1k0 = w1_ref[0:1, :]                                 # (1, C1P)
        w1k1 = w1_ref[1:2, :]
        w1k2 = w1_ref[2:3, :]
        b1v = b1_ref[...]
        h_even = jnp.maximum(xm * w1k0 + xe * w1k1 + xo * w1k2 + b1v, 0.0)
        h_odd = jnp.maximum(xe * w1k0 + xo * w1k1 + xp * w1k2 + b1v, 0.0)
        p1 = jnp.maximum(h_even, h_odd)                       # (N2, C1P) pooled conv1 output

        # ---- conv2 (C1->C2, k=3, pad=1) + ReLU as ONE packed-K matmul on the MXU ----
        zrow = jnp.zeros((TB, C1P), f32)
        p1l = jnp.concatenate([zrow, p1[: N2 - TB, :]], axis=0)   # p1 at l2-1 (zero at l2=0)
        p1r = jnp.concatenate([p1[TB:, :], zrow], axis=0)         # p1 at l2+1 (zero at end)
        packed = jnp.concatenate([p1l, p1, p1r], axis=1)          # (N2, 3*C1P), 128-aligned
        g = jnp.dot(packed.astype(mxu_dtype), w2_ref[...],
                    preferred_element_type=f32) + b2_ref[...]
        g = jnp.maximum(g, 0.0)                               # (N2, C2)

        # ---- MaxPool(2,2) + Linear fused into one (TB, L4*C2) @ (L4*C2, NCP) matmul ----
        chunks = []
        for l4 in range(L4):                                  # L4 is tiny -> static unroll
            lo = g[(2 * l4) * TB:(2 * l4 + 1) * TB, :]        # contiguous TB-row slab
            hi = g[(2 * l4 + 1) * TB:(2 * l4 + 2) * TB, :]
            chunks.append(jnp.maximum(lo, hi))                # pooled (TB, C2)
        flat = jnp.concatenate(chunks, axis=1)                # (TB, L4*C2), fc-ready layout
        out = jnp.dot(flat.astype(mxu_dtype), wfc_ref[...],
                      preferred_element_type=f32) + bfc_ref[...]
        o_ref[...] = out                                      # (TB, NCP) lane-dense store

    # ---- host-side layout prep (pure layout plumbing, no O(N^2) helper matrices) ----
    # x -> pooled-position-major tiles: row = t*N2 + l2*TB + b, cols = (even, odd) position
    x_pm = jnp.reshape(
        jnp.transpose(jnp.reshape(x.astype(f32), (B // TB, TB, L2, 2)), (0, 2, 1, 3)),
        (B // TB * N2, 2))
    # conv1 weight (C1,1,3) -> (3, C1P), padded output channels are zero (relu(0) = 0)
    w1_k = jnp.pad(jnp.transpose(jnp.reshape(jnp.asarray(w1, f32), (C1, 3)), (1, 0)),
                   ((0, 0), (0, C1P - C1)))
    b1_k = jnp.pad(jnp.reshape(jnp.asarray(b1, f32), (1, C1)), ((0, 0), (0, C1P - C1)))
    # conv2 weight (C2,C1,3) -> stacked-K (3*C1P, C2); padded Cin rows are zero
    w2_k = jnp.reshape(jnp.pad(jnp.transpose(jnp.asarray(w2, f32), (2, 1, 0)),
                               ((0, 0), (0, C1P - C1), (0, 0))),
                       (3 * C1P, C2)).astype(mxu_dtype)
    b2_k = jnp.reshape(jnp.asarray(b2, f32), (1, C2))
    # fc weight: torch.flatten of (B,C2,L4) is channel-major (col = c*L4 + l4); our fused
    # operand is position-major (col = l4*C2 + c) -> reorder and pad classes to 128 lanes
    wfc_k = jnp.reshape(jnp.transpose(jnp.reshape(jnp.asarray(wfc, f32), (NC, C2, L4)),
                                      (2, 1, 0)), (L4 * C2, NC))
    wfc_k = jnp.pad(wfc_k, ((0, 0), (0, NCP - NC))).astype(mxu_dtype)
    bfc_k = jnp.pad(jnp.reshape(jnp.asarray(bfc, f32), (1, NC)), ((0, 0), (0, NCP - NC)))

    out_padded = pl.pallas_call(
        kernel,
        out_shape=jax.ShapeDtypeStruct((B, NCP), f32),
        grid=(B // TB,),
        in_specs=[
            pl.BlockSpec((N2, 2), lambda i: (i, 0)),              # x tile (TB samples)
            pl.BlockSpec((3, C1P), lambda i: (0, 0)),             # conv1 weight
            pl.BlockSpec((1, C1P), lambda i: (0, 0)),             # conv1 bias
            pl.BlockSpec((3 * C1P, C2), lambda i: (0, 0)),        # conv2 packed-K weight
            pl.BlockSpec((1, C2), lambda i: (0, 0)),              # conv2 bias
            pl.BlockSpec((L4 * C2, NCP), lambda i: (0, 0)),       # fused fc weight
            pl.BlockSpec((1, NCP), lambda i: (0, 0)),             # fc bias (padded)
        ],
        out_specs=pl.BlockSpec((TB, NCP), lambda i: (i, 0)),
        compiler_params=pltpu.CompilerParams(
            dimension_semantics=("parallel",),
            vmem_limit_bytes=32 * 1024 * 1024),
    )(x_pm, w1_k, b1_k, w2_k, b2_k, wfc_k, bfc_k)
    return out_padded[:, :NC]


def reference_forward(x, w1, b1, w2, b2, wfc, bfc):
    """Pure-numpy replica of CNNModel.forward using torch parameter layouts."""
    x = np.asarray(x, np.float32)
    w1, b1, w2, b2 = map(np.asarray, (w1, b1, w2, b2))
    wfc, bfc = np.asarray(wfc), np.asarray(bfc)

    def conv1d(h, w, b):                        # h: (B, Cin, L), w: (Cout, Cin, 3)
        Bn, _, Ln = h.shape
        hp = np.pad(h, ((0, 0), (0, 0), (1, 1)))
        out = np.zeros((Bn, w.shape[0], Ln), np.float32)
        for k in range(3):
            out += np.einsum('bcl,oc->bol', hp[:, :, k:k + Ln], w[:, :, k])
        return out + b[None, :, None]

    def pool(h):
        Bn, Cn, Ln = h.shape
        return h.reshape(Bn, Cn, Ln // 2, 2).max(axis=3)

    h = x[:, None, :]                           # unsqueeze(1): (B, 1, L)
    h = pool(np.maximum(conv1d(h, w1, b1), 0.0))
    h = pool(np.maximum(conv1d(h, w2, b2), 0.0))
    flat = h.reshape(h.shape[0], -1)            # torch.flatten(x, 1): channel-major
    return flat @ wfc.T + bfc


if __name__ == "__main__":
    B, L, NC = 16, 16, 8          # input_channels = 16 features per sample, num_classes = 8
    C1, C2 = 64, 128
    flattened = C2 * (L // 4)     # 512, matches the lazily-built nn.Linear in the module

    key = jax.random.PRNGKey(0)
    ks = jax.random.split(key, 7)
    x = jax.random.normal(ks[0], (B, L), jnp.float32)
    w1 = jax.random.normal(ks[1], (C1, 1, 3), jnp.float32) * 0.1     # torch (Cout, Cin, K)
    b1 = jax.random.normal(ks[2], (C1,), jnp.float32) * 0.1
    w2 = jax.random.normal(ks[3], (C2, C1, 3), jnp.float32) * 0.05
    b2 = jax.random.normal(ks[4], (C2,), jnp.float32) * 0.05
    wfc = jax.random.normal(ks[5], (NC, flattened), jnp.float32) * 0.02  # torch Linear layout
    bfc = jax.random.normal(ks[6], (NC,), jnp.float32) * 0.02

    ref = reference_forward(x, w1, b1, w2, b2, wfc, bfc)

    # Exact f32 MXU path (tight numerical check) ...
    out_f32 = jax.block_until_ready(
        cnn_forward(x, w1, b1, w2, b2, wfc, bfc, mxu_dtype=jnp.float32))
    np.testing.assert_allclose(np.asarray(out_f32), ref, rtol=1e-4, atol=1e-4)

    # ... and the default bf16-MXU path (2x MXU throughput, f32 accumulation).
    out_bf16 = jax.block_until_ready(cnn_forward(x, w1, b1, w2, b2, wfc, bfc))
    np.testing.assert_allclose(np.asarray(out_bf16), ref, rtol=3e-2, atol=3e-2)

    print("KERNEL_OK")
</pallas_src>

<mosaic_0001>
module attributes {stable_mosaic.version = 11 : i64} {
  func.func @kernel(%arg0: i32, %arg1: memref<128x2xf32, #tpu.memory_space<vmem>>, %arg2: memref<3x128xf32, #tpu.memory_space<vmem>>, %arg3: memref<1x128xf32, #tpu.memory_space<vmem>>, %arg4: memref<384x128xf32, #tpu.memory_space<vmem>>, %arg5: memref<1x128xf32, #tpu.memory_space<vmem>>, %arg6: memref<512x128xf32, #tpu.memory_space<vmem>>, %arg7: memref<1x128xf32, #tpu.memory_space<vmem>>, %arg8: memref<16x128xf32, #tpu.memory_space<vmem>>) attributes {dimension_semantics = [#tpu.dimension_semantics<parallel>], iteration_bounds = array<i64: 1>, scalar_prefetch = 0 : i64, scratch_operands = 0 : i64, tpu.core_type = #tpu.core_type<tc>, window_params = [{transform_indices = @transform_0, window_bounds = array<i64: 128, 2>}, {pipeline_mode = #tpu.pipeline_mode<synchronous>, transform_indices = @transform_1, window_bounds = array<i64: 3, 128>}, {pipeline_mode = #tpu.pipeline_mode<synchronous>, transform_indices = @transform_2, window_bounds = array<i64: 1, 128>}, {pipeline_mode = #tpu.pipeline_mode<synchronous>, transform_indices = @transform_3, window_bounds = array<i64: 384, 128>}, {pipeline_mode = #tpu.pipeline_mode<synchronous>, transform_indices = @transform_4, window_bounds = array<i64: 1, 128>}, {pipeline_mode = #tpu.pipeline_mode<synchronous>, transform_indices = @transform_5, window_bounds = array<i64: 512, 128>}, {pipeline_mode = #tpu.pipeline_mode<synchronous>, transform_indices = @transform_6, window_bounds = array<i64: 1, 128>}, {transform_indices = @transform_7, window_bounds = array<i64: 16, 128>}]} {
    %c0 = arith.constant 0 : index
    %c0_0 = arith.constant 0 : index
    %0 = vector.load %arg1[%c0, %c0_0] : memref<128x2xf32, #tpu.memory_space<vmem>>, vector<128x2xf32>
    %1 = vector.extract_strided_slice %0 {offsets = [0, 0], sizes = [128, 1], strides = [1, 1]} : vector<128x2xf32> to vector<128x1xf32>
    %2 = vector.extract_strided_slice %0 {offsets = [0, 1], sizes = [128, 1], strides = [1, 1]} : vector<128x2xf32> to vector<128x1xf32>
    %cst = arith.constant 0.000000e+00 : f32
    %3 = vector.broadcast %cst : f32 to vector<16x1xf32>
    %4 = vector.extract_strided_slice %2 {offsets = [0, 0], sizes = [112, 1], strides = [1, 1]} : vector<128x1xf32> to vector<112x1xf32>
    %5 = tpu.concatenate %3, %4 in 0 : vector<16x1xf32>, vector<112x1xf32> -> vector<128x1xf32>
    %6 = vector.extract_strided_slice %1 {offsets = [16, 0], sizes = [112, 1], strides = [1, 1]} : vector<128x1xf32> to vector<112x1xf32>
    %7 = tpu.concatenate %6, %3 in 0 : vector<112x1xf32>, vector<16x1xf32> -> vector<128x1xf32>
    %c0_1 = arith.constant 0 : index
    %c0_2 = arith.constant 0 : index
    %8 = vector.load %arg2[%c0_1, %c0_2] : memref<3x128xf32, #tpu.memory_space<vmem>>, vector<1x128xf32>
    %c1 = arith.constant 1 : index
    %c0_3 = arith.constant 0 : index
    %9 = vector.load %arg2[%c1, %c0_3] : memref<3x128xf32, #tpu.memory_space<vmem>>, vector<1x128xf32>
    %c2 = arith.constant 2 : index
    %c0_4 = arith.constant 0 : index
    %10 = vector.load %arg2[%c2, %c0_4] : memref<3x128xf32, #tpu.memory_space<vmem>>, vector<1x128xf32>
    %c0_5 = arith.constant 0 : index
    %c0_6 = arith.constant 0 : index
    %11 = vector.load %arg3[%c0_5, %c0_6] : memref<1x128xf32, #tpu.memory_space<vmem>>, vector<1x128xf32>
    %12 = vector.broadcast %5 : vector<128x1xf32> to vector<128x128xf32>
    %13 = vector.broadcast %8 : vector<1x128xf32> to vector<128x128xf32>
    %14 = arith.mulf %12, %13 : vector<128x128xf32>
    %15 = vector.broadcast %1 : vector<128x1xf32> to vector<128x128xf32>
    %16 = vector.broadcast %9 : vector<1x128xf32> to vector<128x128xf32>
    %17 = arith.mulf %15, %16 : vector<128x128xf32>
    %18 = arith.addf %14, %17 : vector<128x128xf32>
    %19 = vector.broadcast %2 : vector<128x1xf32> to vector<128x128xf32>
    %20 = vector.broadcast %10 : vector<1x128xf32> to vector<128x128xf32>
    %21 = arith.mulf %19, %20 : vector<128x128xf32>
    %22 = arith.addf %18, %21 : vector<128x128xf32>
    %23 = vector.broadcast %11 : vector<1x128xf32> to vector<128x128xf32>
    %24 = arith.addf %22, %23 : vector<128x128xf32>
    %cst_7 = arith.constant 0.000000e+00 : f32
    %25 = vector.broadcast %cst_7 : f32 to vector<128x128xf32>
    %26 = arith.maximumf %24, %25 : vector<128x128xf32>
    %27 = vector.broadcast %1 : vector<128x1xf32> to vector<128x128xf32>
    %28 = vector.broadcast %8 : vector<1x128xf32> to vector<128x128xf32>
    %29 = arith.mulf %27, %28 : vector<128x128xf32>
    %30 = vector.broadcast %2 : vector<128x1xf32> to vector<128x128xf32>
    %31 = vector.broadcast %9 : vector<1x128xf32> to vector<128x128xf32>
    %32 = arith.mulf %30, %31 : vector<128x128xf32>
    %33 = arith.addf %29, %32 : vector<128x128xf32>
    %34 = vector.broadcast %7 : vector<128x1xf32> to vector<128x128xf32>
    %35 = vector.broadcast %10 : vector<1x128xf32> to vector<128x128xf32>
    %36 = arith.mulf %34, %35 : vector<128x128xf32>
    %37 = arith.addf %33, %36 : vector<128x128xf32>
    %38 = vector.broadcast %11 : vector<1x128xf32> to vector<128x128xf32>
    %39 = arith.addf %37, %38 : vector<128x128xf32>
    %cst_8 = arith.constant 0.000000e+00 : f32
    %40 = vector.broadcast %cst_8 : f32 to vector<128x128xf32>
    %41 = arith.maximumf %39, %40 : vector<128x128xf32>
    %42 = arith.maximumf %26, %41 : vector<128x128xf32>
    %cst_9 = arith.constant 0.000000e+00 : f32
    %43 = vector.broadcast %cst_9 : f32 to vector<16x128xf32>
    %44 = vector.extract_strided_slice %42 {offsets = [0, 0], sizes = [112, 128], strides = [1, 1]} : vector<128x128xf32> to vector<112x128xf32>
    %45 = tpu.concatenate %43, %44 in 0 : vector<16x128xf32>, vector<112x128xf32> -> vector<128x128xf32>
    %46 = vector.extract_strided_slice %42 {offsets = [16, 0], sizes = [112, 128], strides = [1, 1]} : vector<128x128xf32> to vector<112x128xf32>
    %47 = tpu.concatenate %46, %43 in 0 : vector<112x128xf32>, vector<16x128xf32> -> vector<128x128xf32>
    %48 = tpu.concatenate %45, %42, %47 in 1 : vector<128x128xf32>, vector<128x128xf32>, vector<128x128xf32> -> vector<128x384xf32>
    %c0_10 = arith.constant 0 : index
    %c0_11 = arith.constant 0 : index
    %49 = vector.load %arg4[%c0_10, %c0_11] : memref<384x128xf32, #tpu.memory_space<vmem>>, vector<384x128xf32>
    %cst_12 = arith.constant dense<0.000000e+00> : vector<128x128xf32>
    %50 = tpu.matmul %48, %49, %cst_12 {dimension_numbers = #tpu.dot_dimension_numbers<[1], [0], [0], [1], [0, 0, 1, 1], [], []>} : vector<128x384xf32>, vector<384x128xf32>, vector<128x128xf32> -> vector<128x128xf32>
    %c0_13 = arith.constant 0 : index
    %c0_14 = arith.constant 0 : index
    %51 = vector.load %arg5[%c0_13, %c0_14] : memref<1x128xf32, #tpu.memory_space<vmem>>, vector<1x128xf32>
    %52 = vector.broadcast %51 : vector<1x128xf32> to vector<128x128xf32>
    %53 = arith.addf %50, %52 : vector<128x128xf32>
    %cst_15 = arith.constant 0.000000e+00 : f32
    %54 = vector.broadcast %cst_15 : f32 to vector<128x128xf32>
    %55 = arith.maximumf %53, %54 : vector<128x128xf32>
    %56 = vector.extract_strided_slice %55 {offsets = [0, 0], sizes = [16, 128], strides = [1, 1]} : vector<128x128xf32> to vector<16x128xf32>
    %57 = vector.extract_strided_slice %55 {offsets = [16, 0], sizes = [16, 128], strides = [1, 1]} : vector<128x128xf32> to vector<16x128xf32>
    %58 = arith.maximumf %56, %57 : vector<16x128xf32>
    %59 = vector.extract_strided_slice %55 {offsets = [32, 0], sizes = [16, 128], strides = [1, 1]} : vector<128x128xf32> to vector<16x128xf32>
    %60 = vector.extract_strided_slice %55 {offsets = [48, 0], sizes = [16, 128], strides = [1, 1]} : vector<128x128xf32> to vector<16x128xf32>
    %61 = arith.maximumf %59, %60 : vector<16x128xf32>
    %62 = vector.extract_strided_slice %55 {offsets = [64, 0], sizes = [16, 128], strides = [1, 1]} : vector<128x128xf32> to vector<16x128xf32>
    %63 = vector.extract_strided_slice %55 {offsets = [80, 0], sizes = [16, 128], strides = [1, 1]} : vector<128x128xf32> to vector<16x128xf32>
    %64 = arith.maximumf %62, %63 : vector<16x128xf32>
    %65 = vector.extract_strided_slice %55 {offsets = [96, 0], sizes = [16, 128], strides = [1, 1]} : vector<128x128xf32> to vector<16x128xf32>
    %66 = vector.extract_strided_slice %55 {offsets = [112, 0], sizes = [16, 128], strides = [1, 1]} : vector<128x128xf32> to vector<16x128xf32>
    %67 = arith.maximumf %65, %66 : vector<16x128xf32>
    %68 = tpu.concatenate %58, %61, %64, %67 in 1 : vector<16x128xf32>, vector<16x128xf32>, vector<16x128xf32>, vector<16x128xf32> -> vector<16x512xf32>
    %c0_16 = arith.constant 0 : index
    %c0_17 = arith.constant 0 : index
    %69 = vector.load %arg6[%c0_16, %c0_17] : memref<512x128xf32, #tpu.memory_space<vmem>>, vector<512x128xf32>
    %cst_18 = arith.constant dense<0.000000e+00> : vector<16x128xf32>
    %70 = tpu.matmul %68, %69, %cst_18 {dimension_numbers = #tpu.dot_dimension_numbers<[1], [0], [0], [1], [0, 0, 1, 1], [], []>} : vector<16x512xf32>, vector<512x128xf32>, vector<16x128xf32> -> vector<16x128xf32>
    %c0_19 = arith.constant 0 : index
    %c0_20 = arith.constant 0 : index
    %71 = vector.load %arg7[%c0_19, %c0_20] : memref<1x128xf32, #tpu.memory_space<vmem>>, vector<1x128xf32>
    %72 = vector.broadcast %71 : vector<1x128xf32> to vector<16x128xf32>
    %73 = arith.addf %70, %72 : vector<16x128xf32>
    %c0_21 = arith.constant 0 : index
    %c0_22 = arith.constant 0 : index
    %74 = vector.load %arg8[%c0_21, %c0_22] : memref<16x128xf32, #tpu.memory_space<vmem>>, vector<16x128xf32>
    tpu.vector_store %arg8[%c0_21, %c0_22], %73 {strides = array<i32>} : memref<16x128xf32, #tpu.memory_space<vmem>>, vector<16x128xf32>,
    return
  }
  func.func @transform_0(%arg0: i32) -> (i32, i32) {
    %c0_i32 = arith.constant 0 : i32
    %c0_i32_0 = arith.constant 0 : i32
    return %arg0, %c0_i32 : i32, i32
  }
  func.func @transform_1(%arg0: i32) -> (i32, i32) {
    %c0_i32 = arith.constant 0 : i32
    %c0_i32_0 = arith.constant 0 : i32
    %c0_i32_1 = arith.constant 0 : i32
    return %c0_i32, %c0_i32_0 : i32, i32
  }
  func.func @transform_2(%arg0: i32) -> (i32, i32) {
    %c0_i32 = arith.constant 0 : i32
    %c0_i32_0 = arith.constant 0 : i32
    %c0_i32_1 = arith.constant 0 : i32
    return %c0_i32, %c0_i32_0 : i32, i32
  }
  func.func @transform_3(%arg0: i32) -> (i32, i32) {
    %c0_i32 = arith.constant 0 : i32
    %c0_i32_0 = arith.constant 0 : i32
    %c0_i32_1 = arith.constant 0 : i32
    return %c0_i32, %c0_i32_0 : i32, i32
  }
  func.func @transform_4(%arg0: i32) -> (i32, i32) {
    %c0_i32 = arith.constant 0 : i32
    %c0_i32_0 = arith.constant 0 : i32
    %c0_i32_1 = arith.constant 0 : i32
    return %c0_i32, %c0_i32_0 : i32, i32
  }
  func.func @transform_5(%arg0: i32) -> (i32, i32) {
    %c0_i32 = arith.constant 0 : i32
    %c0_i32_0 = arith.constant 0 : i32
    %c0_i32_1 = arith.constant 0 : i32
    return %c0_i32, %c0_i32_0 : i32, i32
  }
  func.func @transform_6(%arg0: i32) -> (i32, i32) {
    %c0_i32 = arith.constant 0 : i32
    %c0_i32_0 = arith.constant 0 : i32
    %c0_i32_1 = arith.constant 0 : i32
    return %c0_i32, %c0_i32_0 : i32, i32
  }
  func.func @transform_7(%arg0: i32) -> (i32, i32) {
    %c0_i32 = arith.constant 0 : i32
    %c0_i32_0 = arith.constant 0 : i32
    return %arg0, %c0_i32 : i32, i32
  }
}

</mosaic_0001>

<llo_original>
// kernel: tpu_custom_call.1
$region0: #{tpu_custom_call.1}
  #allocation0 [shape = 'u32[]', space=smem, size = 0x4, offset = 0x4, fixed_abs, tag = 'smem constant byte address 0x4 - core index']
  #allocation1 [shape = 'u32[144,128]{1,0:T(1,128)}', space=vmem, size = 0x12000, scoped, tag = 'internal scratch']
  %s0 = inlined_call_operand.vmem [shape: f32[128,2], index: 0, kind: input, shape index: {}]
  %s1 = inlined_call_operand.vmem [shape: f32[3,128], index: 1, kind: input, shape index: {}]
  %s2 = inlined_call_operand.vmem [shape: f32[1,128], index: 2, kind: input, shape index: {}]
  %s3 = inlined_call_operand.hbm [shape: f32[384,128], index: 3, kind: input, shape index: {}]
  %s4 = inlined_call_operand.vmem [shape: f32[1,128], index: 4, kind: input, shape index: {}]
  %s5 = inlined_call_operand.hbm [shape: f32[512,128], index: 5, kind: input, shape index: {}]
  %s6 = inlined_call_operand.vmem [shape: f32[1,128], index: 6, kind: input, shape index: {}]
  %s7 = inlined_call_operand.hbm [shape: f32[16,128], index: 7, kind: output, shape index: {}]
  %s8 = sld [smem:[#allocation0]]
  $region46: #{tpu_custom_call.1} parent=0
    _
  %s10 = ssub.s32 1, %s8
  %s11 = scalar_select 0, %s10, %s8
  $region1: #{tpu_custom_call.1} parent=0
    #allocation2 [shape = 'u8[196608]{0}', space=vmem, size = 0x30000, scoped, tag = 'input window, operand 3, single buffered']
    #allocation3 [shape = 's32[1]{0}', space=sflag, size = 0x4, scoped, tag = 'scoped memory for tpu_custom_call.1']
    #allocation4 [shape = 's32[1]{0}', space=sflag, size = 0x4, scoped, tag = 'scoped memory for tpu_custom_call.1']
    #allocation5 [shape = 'u8[262144]{0}', space=vmem, size = 0x40000, scoped, tag = 'input window, operand 5, single buffered']
    #allocation6 [shape = 's32[1]{0}', space=sflag, size = 0x4, scoped, tag = 'scoped memory for tpu_custom_call.1']
    #allocation7 [shape = 'u8[8192]{0}', space=vmem, size = 0x2000, scoped, tag = 'output window, operand 0, single buffered']
    %12 = vsyncpa [#allocation3], 0
    %13 = vsyncpa [#allocation6], 0
    %14 = vsyncpa [#allocation4], 0
    // Predicated region
    $region2: #{tpu_custom_call.1} parent=1 // pred_check
      _
    $region3: #{tpu_custom_call.1} parent=1 // pred_check_branch
      %16 = sbr.rel (0) target = $region5
    $region4: #{tpu_custom_call.1} parent=1 // pred_region
      _
    $region5: #{tpu_custom_call.1} parent=1 // pred_fallthru
      _
    // Predicated region
    $region6: #{tpu_custom_call.1} parent=1 // pred_check
      _
    $region7: #{tpu_custom_call.1} parent=1 // pred_check_branch
      %18 = sbr.rel (0) target = $region9
    $region8: #{tpu_custom_call.1} parent=1 // pred_region
      _
    $region9: #{tpu_custom_call.1} parent=1 // pred_fallthru
      _
    // Predicated region
    $region10: #{tpu_custom_call.1} parent=1 // pred_check
      _
    $region11: #{tpu_custom_call.1} parent=1 // pred_check_branch
      %20 = sbr.rel (0) target = $region13
    $region12: #{tpu_custom_call.1} parent=1 // pred_region
      _
    $region13: #{tpu_custom_call.1} parent=1 // pred_fallthru
      _
    // Predicated region
    $region14: #{tpu_custom_call.1} parent=1 // pred_check
      _
    $region15: #{tpu_custom_call.1} parent=1 // pred_check_branch
      %22 = sbr.rel (0) target = $region17
    $region16: #{tpu_custom_call.1} parent=1 // pred_region
      %s24 = ssub.s32 6144, 6144
      %25 = vsyncadd [#allocation3], %s24
      %s26 = sshll.u32 [#allocation2], 4
      %s27 = int_to_ptr.vmem [resolvable:$true] %s26
      %32 = dma.hbm_to_vmem [thread:$0]  %s3, 6144, %s27, [#allocation3], 128, 128, 8
    $region17: #{tpu_custom_call.1} parent=1 // pred_fallthru
      _
    // Predicated region
    $region18: #{tpu_custom_call.1} parent=1 // pred_check
      _
    $region19: #{tpu_custom_call.1} parent=1 // pred_check_branch
      %34 = sbr.rel (0) target = $region21
    $region20: #{tpu_custom_call.1} parent=1 // pred_region
      _
    $region21: #{tpu_custom_call.1} parent=1 // pred_fallthru
      _
    // Predicated region
    $region22: #{tpu_custom_call.1} parent=1 // pred_check
      _
    $region23: #{tpu_custom_call.1} parent=1 // pred_check_branch
      %36 = sbr.rel (0) target = $region25
    $region24: #{tpu_custom_call.1} parent=1 // pred_region
      %s38 = ssub.s32 8192, 8192
      %39 = vsyncadd [#allocation6], %s38
      %s40 = sshll.u32 [#allocation5], 4
      %s41 = int_to_ptr.vmem [resolvable:$true] %s40
      %46 = dma.hbm_to_vmem [thread:$0]  %s5, 8192, %s41, [#allocation6], 128, 128, 8
    $region25: #{tpu_custom_call.1} parent=1 // pred_fallthru
      _
    // Predicated region
    $region26: #{tpu_custom_call.1} parent=1 // pred_check
      _
    $region27: #{tpu_custom_call.1} parent=1 // pred_check_branch
      %48 = sbr.rel (0) target = $region29
    $region28: #{tpu_custom_call.1} parent=1 // pred_region
      _
    $region29: #{tpu_custom_call.1} parent=1 // pred_fallthru
      _
    // Predicated region
    $region30: #{tpu_custom_call.1} parent=1 // pred_check
      _
    $region31: #{tpu_custom_call.1} parent=1 // pred_check_branch
      %50 = sbr.rel (0) target = $region33
    $region32: #{tpu_custom_call.1} parent=1 // pred_region
      %51 = dma.done [#allocation3], 6144
    $region33: #{tpu_custom_call.1} parent=1 // pred_fallthru
      _
    // Predicated region
    $region34: #{tpu_custom_call.1} parent=1 // pred_check
      _
    $region35: #{tpu_custom_call.1} parent=1 // pred_check_branch
      %53 = sbr.rel (0) target = $region37
    $region36: #{tpu_custom_call.1} parent=1 // pred_region
      %54 = dma.done [#allocation6], 8192
    $region37: #{tpu_custom_call.1} parent=1 // pred_fallthru
      _
    %v55 = vld [vmem:[%s0] sm:$0xff]
    %v56 = vld [vmem:[%s0 + $0x8] sm:$0xff]
    %v57 = vld [vmem:[%s0 + $0x10] sm:$0xff]
    %v58 = vld [vmem:[%s0 + $0x18] sm:$0xff]
    %v59 = vld [vmem:[%s0 + $0x20] sm:$0xff]
    %v60 = vld [vmem:[%s0 + $0x28] sm:$0xff]
    %v61 = vld [vmem:[%s0 + $0x30] sm:$0xff]
    %v62 = vld [vmem:[%s0 + $0x38] sm:$0xff]
    %v63 = vld [vmem:[%s0 + $0x40] sm:$0xff]
    %v64 = vld [vmem:[%s0 + $0x48] sm:$0xff]
    %v65 = vld [vmem:[%s0 + $0x50] sm:$0xff]
    %v66 = vld [vmem:[%s0 + $0x58] sm:$0xff]
    %v67 = vld [vmem:[%s0 + $0x60] sm:$0xff]
    %v68 = vld [vmem:[%s0 + $0x68] sm:$0xff]
    %v69 = vld [vmem:[%s0 + $0x70] sm:$0xff]
    %v70 = vld [vmem:[%s0 + $0x78] sm:$0xff]
    %85 = vrot.lane.b32.xlu0 %v55, 127
    %v86 = vpop.permute.xlu0 %85
    %87 = vrot.lane.b32.xlu0 %v56, 127
    %v88 = vpop.permute.xlu0 %87
    %89 = vrot.lane.b32.xlu0 %v57, 127
    %v90 = vpop.permute.xlu0 %89
    %91 = vrot.lane.b32.xlu0 %v58, 127
    %v92 = vpop.permute.xlu0 %91
    %93 = vrot.lane.b32.xlu0 %v59, 127
    %v94 = vpop.permute.xlu0 %93
    %95 = vrot.lane.b32.xlu0 %v60, 127
    %v96 = vpop.permute.xlu0 %95
    %97 = vrot.lane.b32.xlu0 %v61, 127
    %v98 = vpop.permute.xlu0 %97
    %99 = vrot.lane.b32.xlu0 %v62, 127
    %v100 = vpop.permute.xlu0 %99
    %101 = vrot.lane.b32.xlu0 %v63, 127
    %v102 = vpop.permute.xlu0 %101
    %103 = vrot.lane.b32.xlu0 %v64, 127
    %v104 = vpop.permute.xlu0 %103
    %105 = vrot.lane.b32.xlu0 %v65, 127
    %v106 = vpop.permute.xlu0 %105
    %107 = vrot.lane.b32.xlu0 %v66, 127
    %v108 = vpop.permute.xlu0 %107
    %109 = vrot.lane.b32.xlu0 %v67, 127
    %v110 = vpop.permute.xlu0 %109
    %111 = vrot.lane.b32.xlu0 %v68, 127
    %v112 = vpop.permute.xlu0 %111
    %v113 = vld [vmem:[%s1] sm:$0x1]
    %v114 = vld [vmem:[%s1 + $0x1] sm:$0x1]
    %v115 = vld [vmem:[%s1 + $0x2] sm:$0x1]
    %v116 = vld [vmem:[%s2] sm:$0x1]
    %118 = vset.pattern.permute.xlu0 0
    %119 = vperm.xlu0 %118, 0.0
    %v120 = vpop.permute.xlu0 %119
    %122 = vset.pattern.permute.xlu0 0
    %123 = vperm.xlu0 %122, %v86
    %v124 = vpop.permute.xlu0 %123
    %126 = vset.pattern.permute.xlu0 0
    %127 = vperm.xlu0 %126, %v88
    %v128 = vpop.permute.xlu0 %127
    %130 = vset.pattern.permute.xlu0 0
    %131 = vperm.xlu0 %130, %v90
    %v132 = vpop.permute.xlu0 %131
    %134 = vset.pattern.permute.xlu0 0
    %135 = vperm.xlu0 %134, %v92
    %v136 = vpop.permute.xlu0 %135
    %138 = vset.pattern.permute.xlu0 0
    %139 = vperm.xlu0 %138, %v94
    %v140 = vpop.permute.xlu0 %139
    %142 = vset.pattern.permute.xlu0 0
    %143 = vperm.xlu0 %142, %v96
    %v144 = vpop.permute.xlu0 %143
    %146 = vset.pattern.permute.xlu0 0
    %147 = vperm.xlu0 %146, %v98
    %v148 = vpop.permute.xlu0 %147
    %150 = vset.pattern.permute.xlu0 0
    %151 = vperm.xlu0 %150, %v100
    %v152 = vpop.permute.xlu0 %151
    %154 = vset.pattern.permute.xlu0 0
    %155 = vperm.xlu0 %154, %v102
    %v156 = vpop.permute.xlu0 %155
    %158 = vset.pattern.permute.xlu0 0
    %159 = vperm.xlu0 %158, %v104
    %v160 = vpop.permute.xlu0 %159
    %162 = vset.pattern.permute.xlu0 0
    %163 = vperm.xlu0 %162, %v106
    %v164 = vpop.permute.xlu0 %163
    %166 = vset.pattern.permute.xlu0 0
    %167 = vperm.xlu0 %166, %v108
    %v168 = vpop.permute.xlu0 %167
    %170 = vset.pattern.permute.xlu0 0
    %171 = vperm.xlu0 %170, %v110
    %v172 = vpop.permute.xlu0 %171
    %174 = vset.pattern.permute.xlu0 0
    %175 = vperm.xlu0 %174, %v112
    %v176 = vpop.permute.xlu0 %175
    %v178 = vlaneseq
    %v179 = vshrl.u32 %v178, 7
    %v180 = vsub.s32 0, %v179
    %v181 = vrot.slane %v113, %v180
    %v182 = vmul.f32 %v120, %v181
    %v183 = vmul.f32 %v124, %v181
    %v184 = vmul.f32 %v128, %v181
    %v185 = vmul.f32 %v132, %v181
    %v186 = vmul.f32 %v136, %v181
    %v187 = vmul.f32 %v140, %v181
    %v188 = vmul.f32 %v144, %v181
    %v189 = vmul.f32 %v148, %v181
    %v190 = vmul.f32 %v152, %v181
    %v191 = vmul.f32 %v156, %v181
    %v192 = vmul.f32 %v160, %v181
    %v193 = vmul.f32 %v164, %v181
    %v194 = vmul.f32 %v168, %v181
    %v195 = vmul.f32 %v172, %v181
    %v196 = vmul.f32 %v176, %v181
    %197 = vset.pattern.permute.xlu0 0
    %198 = vperm.xlu0 %197, %v55
    %v199 = vpop.permute.xlu0 %198
    %201 = vset.pattern.permute.xlu0 0
    %202 = vperm.xlu0 %201, %v56
    %v203 = vpop.permute.xlu0 %202
    %205 = vset.pattern.permute.xlu0 0
    %206 = vperm.xlu0 %205, %v57
    %v207 = vpop.permute.xlu0 %206
    %209 = vset.pattern.permute.xlu0 0
    %210 = vperm.xlu0 %209, %v58
    %v211 = vpop.permute.xlu0 %210
    %213 = vset.pattern.permute.xlu0 0
    %214 = vperm.xlu0 %213, %v59
    %v215 = vpop.permute.xlu0 %214
    %217 = vset.pattern.permute.xlu0 0
    %218 = vperm.xlu0 %217, %v60
    %v219 = vpop.permute.xlu0 %218
    %221 = vset.pattern.permute.xlu0 0
    %222 = vperm.xlu0 %221, %v61
    %v223 = vpop.permute.xlu0 %222
    %225 = vset.pattern.permute.xlu0 0
    %226 = vperm.xlu0 %225, %v62
    %v227 = vpop.permute.xlu0 %226
    %229 = vset.pattern.permute.xlu0 0
    %230 = vperm.xlu0 %229, %v63
    %v231 = vpop.permute.xlu0 %230
    %233 = vset.pattern.permute.xlu0 0
    %234 = vperm.xlu0 %233, %v64
    %v235 = vpop.permute.xlu0 %234
    %237 = vset.pattern.permute.xlu0 0
    %238 = vperm.xlu0 %237, %v65
    %v239 = vpop.permute.xlu0 %238
    %241 = vset.pattern.permute.xlu0 0
    %242 = vperm.xlu0 %241, %v66
    %v243 = vpop.permute.xlu0 %242
    %245 = vset.pattern.permute.xlu0 0
    %246 = vperm.xlu0 %245, %v67
    %v247 = vpop.permute.xlu0 %246
    %249 = vset.pattern.permute.xlu0 0
    %250 = vperm.xlu0 %249, %v68
    %v251 = vpop.permute.xlu0 %250
    %254 = vset.pattern.permute.xlu0 0
    %255 = vperm.xlu0 %254, %v69
    %v256 = vpop.permute.xlu0 %255
    %259 = vset.pattern.permute.xlu0 0
    %260 = vperm.xlu0 %259, %v70
    %v261 = vpop.permute.xlu0 %260
    %v263 = vlaneseq
    %v264 = vshrl.u32 %v263, 7
    %v265 = vsub.s32 0, %v264
    %v266 = vrot.slane %v114, %v265
    %v267 = vmul.f32 %v199, %v266
    %v268 = vmul.f32 %v203, %v266
    %v269 = vmul.f32 %v207, %v266
    %v270 = vmul.f32 %v211, %v266
    %v271 = vmul.f32 %v215, %v266
    %v272 = vmul.f32 %v219, %v266
    %v273 = vmul.f32 %v223, %v266
    %v274 = vmul.f32 %v227, %v266
    %v275 = vmul.f32 %v231, %v266
    %v276 = vmul.f32 %v235, %v266
    %v277 = vmul.f32 %v239, %v266
    %v278 = vmul.f32 %v243, %v266
    %v279 = vmul.f32 %v247, %v266
    %v280 = vmul.f32 %v251, %v266
    %v281 = vmul.f32 %v256, %v266
    %v282 = vmul.f32 %v261, %v266
    %v283 = vadd.f32 %v182, %v267
    %v284 = vadd.f32 %v182, %v268
    %v285 = vadd.f32 %v183, %v269
    %v286 = vadd.f32 %v184, %v270
    %v287 = vadd.f32 %v185, %v271
    %v288 = vadd.f32 %v186, %v272
    %v289 = vadd.f32 %v187, %v273
    %v290 = vadd.f32 %v188, %v274
    %v291 = vadd.f32 %v189, %v275
    %v292 = vadd.f32 %v190, %v276
    %v293 = vadd.f32 %v191, %v277
    %v294 = vadd.f32 %v192, %v278
    %v295 = vadd.f32 %v193, %v279
    %v296 = vadd.f32 %v194, %v280
    %v297 = vadd.f32 %v195, %v281
    %v298 = vadd.f32 %v196, %v282
    %299 = vset.pattern.permute.xlu0 1
    %300 = vperm.xlu0 %299, %v55
    %v301 = vpop.permute.xlu0 %300
    %303 = vset.pattern.permute.xlu0 1
    %304 = vperm.xlu0 %303, %v56
    %v305 = vpop.permute.xlu0 %304
    %307 = vset.pattern.permute.xlu0 1
    %308 = vperm.xlu0 %307, %v57
    %v309 = vpop.permute.xlu0 %308
    %311 = vset.pattern.permute.xlu0 1
    %312 = vperm.xlu0 %311, %v58
    %v313 = vpop.permute.xlu0 %312
    %315 = vset.pattern.permute.xlu0 1
    %316 = vperm.xlu0 %315, %v59
    %v317 = vpop.permute.xlu0 %316
    %319 = vset.pattern.permute.xlu0 1
    %320 = vperm.xlu0 %319, %v60
    %v321 = vpop.permute.xlu0 %320
    %323 = vset.pattern.permute.xlu0 1
    %324 = vperm.xlu0 %323, %v61
    %v325 = vpop.permute.xlu0 %324
    %327 = vset.pattern.permute.xlu0 1
    %328 = vperm.xlu0 %327, %v62
    %v329 = vpop.permute.xlu0 %328
    %331 = vset.pattern.permute.xlu0 1
    %332 = vperm.xlu0 %331, %v63
    %v333 = vpop.permute.xlu0 %332
    %335 = vset.pattern.permute.xlu0 1
    %336 = vperm.xlu0 %335, %v64
    %v337 = vpop.permute.xlu0 %336
    %339 = vset.pattern.permute.xlu0 1
    %340 = vperm.xlu0 %339, %v65
    %v341 = vpop.permute.xlu0 %340
    %343 = vset.pattern.permute.xlu0 1
    %344 = vperm.xlu0 %343, %v66
    %v345 = vpop.permute.xlu0 %344
    %347 = vset.pattern.permute.xlu0 1
    %348 = vperm.xlu0 %347, %v67
    %v349 = vpop.permute.xlu0 %348
    %351 = vset.pattern.permute.xlu0 1
    %352 = vperm.xlu0 %351, %v68
    %v353 = vpop.permute.xlu0 %352
    %355 = vset.pattern.permute.xlu0 1
    %356 = vperm.xlu0 %355, %v69
    %v357 = vpop.permute.xlu0 %356
    %359 = vset.pattern.permute.xlu0 1
    %360 = vperm.xlu0 %359, %v70
    %v361 = vpop.permute.xlu0 %360
    %v363 = vlaneseq
    %v364 = vshrl.u32 %v363, 7
    %v365 = vsub.s32 0, %v364
    %v366 = vrot.slane %v115, %v365
    %v367 = vmul.f32 %v301, %v366
    %v368 = vmul.f32 %v305, %v366
    %v369 = vmul.f32 %v309, %v366
    %v370 = vmul.f32 %v313, %v366
    %v371 = vmul.f32 %v317, %v366
    %v372 = vmul.f32 %v321, %v366
    %v373 = vmul.f32 %v325, %v366
    %v374 = vmul.f32 %v329, %v366
    %v375 = vmul.f32 %v333, %v366
    %v376 = vmul.f32 %v337, %v366
    %v377 = vmul.f32 %v341, %v366
    %v378 = vmul.f32 %v345, %v366
    %v379 = vmul.f32 %v349, %v366
    %v380 = vmul.f32 %v353, %v366
    %v381 = vmul.f32 %v357, %v366
    %v382 = vmul.f32 %v361, %v366
    %v383 = vadd.f32 %v283, %v367
    %v384 = vadd.f32 %v284, %v368
    %v385 = vadd.f32 %v285, %v369
    %v386 = vadd.f32 %v286, %v370
    %v387 = vadd.f32 %v287, %v371
    %v388 = vadd.f32 %v288, %v372
    %v389 = vadd.f32 %v289, %v373
    %v390 = vadd.f32 %v290, %v374
    %v391 = vadd.f32 %v291, %v375
    %v392 = vadd.f32 %v292, %v376
    %v393 = vadd.f32 %v293, %v377
    %v394 = vadd.f32 %v294, %v378
    %v395 = vadd.f32 %v295, %v379
    %v396 = vadd.f32 %v296, %v380
    %v397 = vadd.f32 %v297, %v381
    %v398 = vadd.f32 %v298, %v382
    %v400 = vlaneseq
    %v401 = vshrl.u32 %v400, 7
    %v402 = vsub.s32 0, %v401
    %v403 = vrot.slane %v116, %v402
    %v405 = vadd.f32 %v383, %v403
    %v406 = vadd.f32 %v384, %v403
    %v407 = vadd.f32 %v385, %v403
    %v408 = vadd.f32 %v386, %v403
    %v409 = vadd.f32 %v387, %v403
    %v410 = vadd.f32 %v388, %v403
    %v411 = vadd.f32 %v389, %v403
    %v412 = vadd.f32 %v390, %v403
    %v413 = vadd.f32 %v391, %v403
    %v414 = vadd.f32 %v392, %v403
    %v415 = vadd.f32 %v393, %v403
    %v416 = vadd.f32 %v394, %v403
    %v417 = vadd.f32 %v395, %v403
    %v418 = vadd.f32 %v396, %v403
    %v419 = vadd.f32 %v397, %v403
    %v420 = vadd.f32 %v398, %v403
    %v421 = vmax.f32 %v405, 0.0
    %v422 = vmax.f32 %v406, 0.0
    %v423 = vmax.f32 %v407, 0.0
    %v424 = vmax.f32 %v408, 0.0
    %v425 = vmax.f32 %v409, 0.0
    %v426 = vmax.f32 %v410, 0.0
    %v427 = vmax.f32 %v411, 0.0
    %v428 = vmax.f32 %v412, 0.0
    %v429 = vmax.f32 %v413, 0.0
    %v430 = vmax.f32 %v414, 0.0
    %v431 = vmax.f32 %v415, 0.0
    %v432 = vmax.f32 %v416, 0.0
    %v433 = vmax.f32 %v417, 0.0
    %v434 = vmax.f32 %v418, 0.0
    %v435 = vmax.f32 %v419, 0.0
    %v436 = vmax.f32 %v420, 0.0
    %v437 = vmul.f32 %v199, %v181
    %v438 = vmul.f32 %v203, %v181
    %v439 = vmul.f32 %v207, %v181
    %v440 = vmul.f32 %v211, %v181
    %v441 = vmul.f32 %v215, %v181
    %v442 = vmul.f32 %v219, %v181
    %v443 = vmul.f32 %v223, %v181
    %v444 = vmul.f32 %v227, %v181
    %v445 = vmul.f32 %v231, %v181
    %v446 = vmul.f32 %v235, %v181
    %v447 = vmul.f32 %v239, %v181
    %v448 = vmul.f32 %v243, %v181
    %v449 = vmul.f32 %v247, %v181
    %v450 = vmul.f32 %v251, %v181
    %v451 = vmul.f32 %v256, %v181
    %v452 = vmul.f32 %v261, %v181
    %v453 = vmul.f32 %v301, %v266
    %v454 = vmul.f32 %v305, %v266
    %v455 = vmul.f32 %v309, %v266
    %v456 = vmul.f32 %v313, %v266
    %v457 = vmul.f32 %v317, %v266
    %v458 = vmul.f32 %v321, %v266
    %v459 = vmul.f32 %v325, %v266
    %v460 = vmul.f32 %v329, %v266
    %v461 = vmul.f32 %v333, %v266
    %v462 = vmul.f32 %v337, %v266
    %v463 = vmul.f32 %v341, %v266
    %v464 = vmul.f32 %v345, %v266
    %v465 = vmul.f32 %v349, %v266
    %v466 = vmul.f32 %v353, %v266
    %v467 = vmul.f32 %v357, %v266
    %v468 = vmul.f32 %v361, %v266
    %v469 = vadd.f32 %v437, %v453
    %v470 = vadd.f32 %v438, %v454
    %v471 = vadd.f32 %v439, %v455
    %v472 = vadd.f32 %v440, %v456
    %v473 = vadd.f32 %v441, %v457
    %v474 = vadd.f32 %v442, %v458
    %v475 = vadd.f32 %v443, %v459
    %v476 = vadd.f32 %v444, %v460
    %v477 = vadd.f32 %v445, %v461
    %v478 = vadd.f32 %v446, %v462
    %v479 = vadd.f32 %v447, %v463
    %v480 = vadd.f32 %v448, %v464
    %v481 = vadd.f32 %v449, %v465
    %v482 = vadd.f32 %v450, %v466
    %v483 = vadd.f32 %v451, %v467
    %v484 = vadd.f32 %v452, %v468
    %v485 = vmul.f32 %v207, %v366
    %v486 = vmul.f32 %v211, %v366
    %v487 = vmul.f32 %v215, %v366
    %v488 = vmul.f32 %v219, %v366
    %v489 = vmul.f32 %v223, %v366
    %v490 = vmul.f32 %v227, %v366
    %v491 = vmul.f32 %v231, %v366
    %v492 = vmul.f32 %v235, %v366
    %v493 = vmul.f32 %v239, %v366
    %v494 = vmul.f32 %v243, %v366
    %v495 = vmul.f32 %v247, %v366
    %v496 = vmul.f32 %v251, %v366
    %v497 = vmul.f32 %v256, %v366
    %v498 = vmul.f32 %v261, %v366
    %v499 = vmul.f32 %v120, %v366
    %v500 = vadd.f32 %v469, %v485
    %v501 = vadd.f32 %v470, %v486
    %v502 = vadd.f32 %v471, %v487
    %v503 = vadd.f32 %v472, %v488
    %v504 = vadd.f32 %v473, %v489
    %v505 = vadd.f32 %v474, %v490
    %v506 = vadd.f32 %v475, %v491
    %v507 = vadd.f32 %v476, %v492
    %v508 = vadd.f32 %v477, %v493
    %v509 = vadd.f32 %v478, %v494
    %v510 = vadd.f32 %v479, %v495
    %v511 = vadd.f32 %v480, %v496
    %v512 = vadd.f32 %v481, %v497
    %v513 = vadd.f32 %v482, %v498
    %v514 = vadd.f32 %v483, %v499
    %v515 = vadd.f32 %v484, %v499
    %v516 = vadd.f32 %v500, %v403
    %v517 = vadd.f32 %v501, %v403
    %v518 = vadd.f32 %v502, %v403
    %v519 = vadd.f32 %v503, %v403
    %v520 = vadd.f32 %v504, %v403
    %v521 = vadd.f32 %v505, %v403
    %v522 = vadd.f32 %v506, %v403
    %v523 = vadd.f32 %v507, %v403
    %v524 = vadd.f32 %v508, %v403
    %v525 = vadd.f32 %v509, %v403
    %v526 = vadd.f32 %v510, %v403
    %v527 = vadd.f32 %v511, %v403
    %v528 = vadd.f32 %v512, %v403
    %v529 = vadd.f32 %v513, %v403
    %v530 = vadd.f32 %v514, %v403
    %v531 = vadd.f32 %v515, %v403
    %v532 = vmax.f32 %v516, 0.0
    %v533 = vmax.f32 %v517, 0.0
    %v534 = vmax.f32 %v518, 0.0
    %v535 = vmax.f32 %v519, 0.0
    %v536 = vmax.f32 %v520, 0.0
    %v537 = vmax.f32 %v521, 0.0
    %v538 = vmax.f32 %v522, 0.0
    %v539 = vmax.f32 %v523, 0.0
    %v540 = vmax.f32 %v524, 0.0
    %v541 = vmax.f32 %v525, 0.0
    %v542 = vmax.f32 %v526, 0.0
    %v543 = vmax.f32 %v527, 0.0
    %v544 = vmax.f32 %v528, 0.0
    %v545 = vmax.f32 %v529, 0.0
    %v546 = vmax.f32 %v530, 0.0
    %v547 = vmax.f32 %v531, 0.0
    %v548 = vmax.f32 %v421, %v532
    %v549 = vmax.f32 %v422, %v533
    %v550 = vmax.f32 %v423, %v534
    %v551 = vmax.f32 %v424, %v535
    %v552 = vmax.f32 %v425, %v536
    %v553 = vmax.f32 %v426, %v537
    %v554 = vmax.f32 %v427, %v538
    %v555 = vmax.f32 %v428, %v539
    %v556 = vmax.f32 %v429, %v540
    %v557 = vmax.f32 %v430, %v541
    %v558 = vmax.f32 %v431, %v542
    %v559 = vmax.f32 %v432, %v543
    %v560 = vmax.f32 %v433, %v544
    %v561 = vmax.f32 %v434, %v545
    %v562 = vmax.f32 %v435, %v546
    %v563 = vmax.f32 %v436, %v547
    %v564 = vld [vmem:[#allocation2] sm:$0xff]
    %v565 = vld [vmem:[#allocation2 + $0x8] sm:$0xff]
    %v566 = vld [vmem:[#allocation2 + $0x10] sm:$0xff]
    %v567 = vld [vmem:[#allocation2 + $0x18] sm:$0xff]
    %v568 = vld [vmem:[#allocation2 + $0x20] sm:$0xff]
    %v569 = vld [vmem:[#allocation2 + $0x28] sm:$0xff]
    %v570 = vld [vmem:[#allocation2 + $0x30] sm:$0xff]
    %v571 = vld [vmem:[#allocation2 + $0x38] sm:$0xff]
    %v572 = vld [vmem:[#allocation2 + $0x40] sm:$0xff]
    %v573 = vld [vmem:[#allocation2 + $0x48] sm:$0xff]
    %v574 = vld [vmem:[#allocation2 + $0x50] sm:$0xff]
    %v575 = vld [vmem:[#allocation2 + $0x58] sm:$0xff]
    %v576 = vld [vmem:[#allocation2 + $0x60] sm:$0xff]
    %v577 = vld [vmem:[#allocation2 + $0x68] sm:$0xff]
    %v578 = vld [vmem:[#allocation2 + $0x70] sm:$0xff]
    %v579 = vld [vmem:[#allocation2 + $0x78] sm:$0xff]
    %v580 = vld [vmem:[#allocation2 + $0x80] sm:$0xff]
    %v581 = vld [vmem:[#allocation2 + $0x88] sm:$0xff]
    %v582 = vld [vmem:[#allocation2 + $0x90] sm:$0xff]
    %v583 = vld [vmem:[#allocation2 + $0x98] sm:$0xff]
    %v584 = vld [vmem:[#allocation2 + $0xa0] sm:$0xff]
    %v585 = vld [vmem:[#allocation2 + $0xa8] sm:$0xff]
    %v586 = vld [vmem:[#allocation2 + $0xb0] sm:$0xff]
    %v587 = vld [vmem:[#allocation2 + $0xb8] sm:$0xff]
    %v588 = vld [vmem:[#allocation2 + $0xc0] sm:$0xff]
    %v589 = vld [vmem:[#allocation2 + $0xc8] sm:$0xff]
    %v590 = vld [vmem:[#allocation2 + $0xd0] sm:$0xff]
    %v591 = vld [vmem:[#allocation2 + $0xd8] sm:$0xff]
    %v592 = vld [vmem:[#allocation2 + $0xe0] sm:$0xff]
    %v593 = vld [vmem:[#allocation2 + $0xe8] sm:$0xff]
    %v594 = vld [vmem:[#allocation2 + $0xf0] sm:$0xff]
    %v595 = vld [vmem:[#allocation2 + $0xf8] sm:$0xff]
    %v596 = vld [vmem:[#allocation2 + $0x100] sm:$0xff]
    %v597 = vld [vmem:[#allocation2 + $0x108] sm:$0xff]
    %v598 = vld [vmem:[#allocation2 + $0x110] sm:$0xff]
    %v599 = vld [vmem:[#allocation2 + $0x118] sm:$0xff]
    %v600 = vld [vmem:[#allocation2 + $0x120] sm:$0xff]
    %v601 = vld [vmem:[#allocation2 + $0x128] sm:$0xff]
    %v602 = vld [vmem:[#allocation2 + $0x130] sm:$0xff]
    %v603 = vld [vmem:[#allocation2 + $0x138] sm:$0xff]
    %v604 = vld [vmem:[#allocation2 + $0x140] sm:$0xff]
    %v605 = vld [vmem:[#allocation2 + $0x148] sm:$0xff]
    %v606 = vld [vmem:[#allocation2 + $0x150] sm:$0xff]
    %v607 = vld [vmem:[#allocation2 + $0x158] sm:$0xff]
    %v608 = vld [vmem:[#allocation2 + $0x160] sm:$0xff]
    %v609 = vld [vmem:[#allocation2 + $0x168] sm:$0xff]
    %v610 = vld [vmem:[#allocation2 + $0x170] sm:$0xff]
    %v611 = vld [vmem:[#allocation2 + $0x178] sm:$0xff]
    %v612 = vld [vmem:[%s4] sm:$0x1]
    %v614 = vlaneseq
    %v615 = vshrl.u32 %v614, 7
    %v616 = vsub.s32 0, %v615
    %v617 = vrot.slane %v612, %v616
    %619 = vmatprep.subr.mxu0 0.0
    %620 = vmatpush1.msra.mxu0 %v564
    %621 = vmatprep.subr.mxu0 0.0
    %622 = vmatpush1.msra.mxu0 %v565
    %623 = vmatprep.subr.mxu0 0.0
    %624 = vmatpush1.msra.mxu0 %v566
    %625 = vmatprep.subr.mxu0 0.0
    %626 = vmatpush1.msra.mxu0 %v567
    %627 = vmatprep.subr.mxu0 0.0
    %628 = vmatpush1.msra.mxu0 %v568
    %629 = vmatprep.subr.mxu0 0.0
    %630 = vmatpush1.msra.mxu0 %v569
    %631 = vmatprep.subr.mxu0 0.0
    %632 = vmatpush1.msra.mxu0 %v570
    %633 = vmatprep.subr.mxu0 0.0
    %634 = vmatpush1.msra.mxu0 %v571
    %635 = vmatprep.subr.mxu0 0.0
    %636 = vmatpush1.msra.mxu0 %v572
    %637 = vmatprep.subr.mxu0 0.0
    %638 = vmatpush1.msra.mxu0 %v573
    %639 = vmatprep.subr.mxu0 0.0
    %640 = vmatpush1.msra.mxu0 %v574
    %641 = vmatprep.subr.mxu0 0.0
    %642 = vmatpush1.msra.mxu0 %v575
    %643 = vmatprep.subr.mxu0 0.0
    %644 = vmatpush1.msra.mxu0 %v576
    %645 = vmatprep.subr.mxu0 0.0
    %646 = vmatpush1.msra.mxu0 %v577
    %647 = vmatprep.subr.mxu0 0.0
    %648 = vmatpush1.msra.mxu0 %v578
    %649 = vmatprep.subr.mxu0 0.0
    %650 = vmatpush1.msra.mxu0 %v579
    %651 = vmatprep.subr.mxu0 0.0
    %652 = vmatpush1.msra.mxu0 %v580
    %653 = vmatprep.subr.mxu0 0.0
    %654 = vmatpush1.msra.mxu0 %v581
    %655 = vmatprep.subr.mxu0 0.0
    %656 = vmatpush1.msra.mxu0 %v582
    %657 = vmatprep.subr.mxu0 0.0
    %658 = vmatpush1.msra.mxu0 %v583
    %659 = vmatprep.subr.mxu0 0.0
    %660 = vmatpush1.msra.mxu0 %v584
    %661 = vmatprep.subr.mxu0 0.0
    %662 = vmatpush1.msra.mxu0 %v585
    %663 = vmatprep.subr.mxu0 0.0
    %664 = vmatpush1.msra.mxu0 %v586
    %665 = vmatprep.subr.mxu0 0.0
    %666 = vmatpush1.msra.mxu0 %v587
    %667 = vmatprep.subr.mxu0 0.0
    %668 = vmatpush1.msra.mxu0 %v588
    %669 = vmatprep.subr.mxu0 0.0
    %670 = vmatpush1.msra.mxu0 %v589
    %671 = vmatprep.subr.mxu0 0.0
    %672 = vmatpush1.msra.mxu0 %v590
    %673 = vmatprep.subr.mxu0 0.0
    %674 = vmatpush1.msra.mxu0 %v591
    %675 = vmatprep.subr.mxu0 0.0
    %676 = vmatpush1.msra.mxu0 %v592
    %677 = vmatprep.subr.mxu0 0.0
    %678 = vmatpush1.msra.mxu0 %v593
    %679 = vmatprep.subr.mxu0 0.0
    %680 = vmatpush1.msra.mxu0 %v594
    %681 = vmatprep.subr.mxu0 0.0
    %682 = vmatpush1.msra.mxu0 %v595
    %683 = vmatprep.mubr.f32.mxu0 %v548
    %684 = vmatmul.mubr.f32.gmra.mrb[0].mxu0 0.0
    %v685 = vpop.f32.mrb[0].mxu0
    %v686 = vadd.f32 %v617, %v685
    %v687 = vpop.f32.mrb[0].mxu0
    %688 = vmatprep.mubr.f32.mxu0 %v549
    %689 = vmatmul.mubr.f32.gmra.mrb[0].mxu0 0.0
    %v690 = vpop.f32.mrb[0].mxu0
    %v691 = vadd.f32 %v617, %v690
    %v692 = vpop.f32.mrb[0].mxu0
    %693 = vmatprep.mubr.f32.mxu0 %v550
    %694 = vmatmul.mubr.f32.gmra.mrb[0].mxu0 %v548
    %v695 = vpop.f32.mrb[0].mxu0
    %v696 = vadd.f32 %v617, %v695
    %v697 = vpop.f32.mrb[0].mxu0
    %698 = vmatprep.mubr.f32.mxu0 %v551
    %699 = vmatmul.mubr.f32.gmra.mrb[0].mxu0 %v549
    %v700 = vpop.f32.mrb[0].mxu0
    %v701 = vadd.f32 %v617, %v700
    %v702 = vpop.f32.mrb[0].mxu0
    %703 = vmatprep.mubr.f32.mxu0 %v552
    %704 = vmatmul.mubr.f32.gmra.mrb[0].mxu0 %v550
    %v705 = vpop.f32.mrb[0].mxu0
    %v706 = vadd.f32 %v617, %v705
    %v707 = vpop.f32.mrb[0].mxu0
    %708 = vmatprep.mubr.f32.mxu0 %v553
    %709 = vmatmul.mubr.f32.gmra.mrb[0].mxu0 %v551
    %v710 = vpop.f32.mrb[0].mxu0
    %v711 = vadd.f32 %v617, %v710
    %v712 = vpop.f32.mrb[0].mxu0
    %713 = vmatprep.mubr.f32.mxu0 %v554
    %714 = vmatmul.mubr.f32.gmra.mrb[0].mxu0 %v552
    %v715 = vpop.f32.mrb[0].mxu0
    %v716 = vadd.f32 %v617, %v715
    %v717 = vpop.f32.mrb[0].mxu0
    %718 = vmatprep.mubr.f32.mxu0 %v555
    %719 = vmatmul.mubr.f32.gmra.mrb[0].mxu0 %v553
    %v720 = vpop.f32.mrb[0].mxu0
    %v721 = vadd.f32 %v617, %v720
    %v722 = vpop.f32.mrb[0].mxu0
    %723 = vmatprep.mubr.f32.mxu0 %v556
    %724 = vmatmul.mubr.f32.gmra.mrb[0].mxu0 %v554
    %v725 = vpop.f32.mrb[0].mxu0
    %v726 = vadd.f32 %v617, %v725
    %v727 = vpop.f32.mrb[0].mxu0
    %728 = vmatprep.mubr.f32.mxu0 %v557
    %729 = vmatmul.mubr.f32.gmra.mrb[0].mxu0 %v555
    %v730 = vpop.f32.mrb[0].mxu0
    %v731 = vadd.f32 %v617, %v730
    %v732 = vpop.f32.mrb[0].mxu0
    %733 = vmatprep.mubr.f32.mxu0 %v558
    %734 = vmatmul.mubr.f32.gmra.mrb[0].mxu0 %v556
    %v735 = vpop.f32.mrb[0].mxu0
    %v736 = vadd.f32 %v617, %v735
    %v737 = vpop.f32.mrb[0].mxu0
    %738 = vmatprep.mubr.f32.mxu0 %v559
    %739 = vmatmul.mubr.f32.gmra.mrb[0].mxu0 %v557
    %v740 = vpop.f32.mrb[0].mxu0
    %v741 = vadd.f32 %v617, %v740
    %v742 = vpop.f32.mrb[0].mxu0
    %743 = vmatprep.mubr.f32.mxu0 %v560
    %744 = vmatmul.mubr.f32.gmra.mrb[0].mxu0 %v558
    %v745 = vpop.f32.mrb[0].mxu0
    %v746 = vadd.f32 %v617, %v745
    %v747 = vpop.f32.mrb[0].mxu0
    %748 = vmatprep.mubr.f32.mxu0 %v561
    %749 = vmatmul.mubr.f32.gmra.mrb[0].mxu0 %v559
    %v750 = vpop.f32.mrb[0].mxu0
    %v751 = vadd.f32 %v617, %v750
    %v752 = vpop.f32.mrb[0].mxu0
    %753 = vmatprep.mubr.f32.mxu0 %v562
    %754 = vmatmul.mubr.f32.gmra.mrb[0].mxu0 %v560
    %v755 = vpop.f32.mrb[0].mxu0
    %v756 = vadd.f32 %v617, %v755
    %v757 = vpop.f32.mrb[0].mxu0
    %758 = vmatprep.mubr.f32.mxu0 %v563
    %759 = vmatmul.mubr.f32.gmra.mrb[0].mxu0 %v561
    %v760 = vpop.f32.mrb[0].mxu0
    %v761 = vadd.f32 %v617, %v760
    %v762 = vpop.f32.mrb[0].mxu0
    %763 = vdwg.mxu0
    %764 = vmatprep.subr.mxu0 0.0
    %765 = vmatpush1.msra.mxu0 %v596
    %766 = vmatprep.subr.mxu0 0.0
    %767 = vmatpush1.msra.mxu0 %v597
    %768 = vmatprep.subr.mxu0 0.0
    %769 = vmatpush1.msra.mxu0 %v598
    %770 = vmatprep.subr.mxu0 0.0
    %771 = vmatpush1.msra.mxu0 %v599
    %772 = vmatprep.subr.mxu0 0.0
    %773 = vmatpush1.msra.mxu0 %v600
    %774 = vmatprep.subr.mxu0 0.0
    %775 = vmatpush1.msra.mxu0 %v601
    %776 = vmatprep.subr.mxu0 0.0
    %777 = vmatpush1.msra.mxu0 %v602
    %778 = vmatprep.subr.mxu0 0.0
    %779 = vmatpush1.msra.mxu0 %v603
    %780 = vmatprep.subr.mxu0 0.0
    %781 = vmatpush1.msra.mxu0 %v604
    %782 = vmatprep.subr.mxu0 0.0
    %783 = vmatpush1.msra.mxu0 %v605
    %784 = vmatprep.subr.mxu0 0.0
    %785 = vmatpush1.msra.mxu0 %v606
    %786 = vmatprep.subr.mxu0 0.0
    %787 = vmatpush1.msra.mxu0 %v607
    %788 = vmatprep.subr.mxu0 0.0
    %789 = vmatpush1.msra.mxu0 %v608
    %790 = vmatprep.subr.mxu0 0.0
    %791 = vmatpush1.msra.mxu0 %v609
    %792 = vmatprep.subr.mxu0 0.0
    %793 = vmatpush1.msra.mxu0 %v610
    %794 = vmatprep.subr.mxu0 0.0
    %795 = vmatpush1.msra.mxu0 %v611
    %796 = vmatprep.subr.mxu0 0.0
    %797 = vmatpush1.msra.mxu0 0.0
    %798 = vmatprep.subr.mxu0 0.0
    %799 = vmatpush1.msra.mxu0 0.0
    %800 = vmatprep.subr.mxu0 0.0
    %801 = vmatpush1.msra.mxu0 0.0
    %802 = vmatprep.subr.mxu0 0.0
    %803 = vmatpush1.msra.mxu0 0.0
    %804 = vmatprep.subr.mxu0 0.0
    %805 = vmatpush1.msra.mxu0 0.0
    %806 = vmatprep.subr.mxu0 0.0
    %807 = vmatpush1.msra.mxu0 0.0
    %808 = vmatprep.subr.mxu0 0.0
    %809 = vmatpush1.msra.mxu0 0.0
    %810 = vmatprep.subr.mxu0 0.0
    %811 = vmatpush1.msra.mxu0 0.0
    %812 = vmatprep.subr.mxu0 0.0
    %813 = vmatpush1.msra.mxu0 0.0
    %814 = vmatprep.subr.mxu0 0.0
    %815 = vmatpush1.msra.mxu0 0.0
    %816 = vmatprep.subr.mxu0 0.0
    %817 = vmatpush1.msra.mxu0 0.0
    %818 = vmatprep.subr.mxu0 0.0
    %819 = vmatpush1.msra.mxu0 0.0
    %820 = vmatprep.subr.mxu0 0.0
    %821 = vmatpush1.msra.mxu0 0.0
    %822 = vmatprep.subr.mxu0 0.0
    %823 = vmatpush1.msra.mxu0 0.0
    %824 = vmatprep.subr.mxu0 0.0
    %825 = vmatpush1.msra.mxu0 0.0
    %826 = vmatprep.subr.mxu0 0.0
    %827 = vmatpush1.msra.mxu0 0.0
    %828 = vmatprep.mubr.f32.mxu0 0.0
    %829 = vmatmul.mubr.f32.gmra.mrb[0].mxu0 %v550
    %v830 = vpop.f32.mrb[0].mxu0
    %v831 = vadd.f32 %v686, %v830
    %v832 = vpop.f32.mrb[0].mxu0
    %833 = vmatprep.mubr.f32.mxu0 0.0
    %834 = vmatmul.mubr.f32.gmra.mrb[0].mxu0 %v551
    %v835 = vpop.f32.mrb[0].mxu0
    %v836 = vadd.f32 %v691, %v835
    %v837 = vpop.f32.mrb[0].mxu0
    %838 = vmatprep.mubr.f32.mxu0 0.0
    %839 = vmatmul.mubr.f32.gmra.mrb[0].mxu0 %v552
    %v840 = vpop.f32.mrb[0].mxu0
    %v841 = vadd.f32 %v696, %v840
    %v842 = vpop.f32.mrb[0].mxu0
    %843 = vmatprep.mubr.f32.mxu0 0.0
    %844 = vmatmul.mubr.f32.gmra.mrb[0].mxu0 %v553
    %v845 = vpop.f32.mrb[0].mxu0
    %v846 = vadd.f32 %v701, %v845
    %v847 = vpop.f32.mrb[0].mxu0
    %848 = vmatprep.mubr.f32.mxu0 0.0
    %849 = vmatmul.mubr.f32.gmra.mrb[0].mxu0 %v554
    %v850 = vpop.f32.mrb[0].mxu0
    %v851 = vadd.f32 %v706, %v850
    %v852 = vpop.f32.mrb[0].mxu0
    %853 = vmatprep.mubr.f32.mxu0 0.0
    %854 = vmatmul.mubr.f32.gmra.mrb[0].mxu0 %v555
    %v855 = vpop.f32.mrb[0].mxu0
    %v856 = vadd.f32 %v711, %v855
    %v857 = vpop.f32.mrb[0].mxu0
    %858 = vmatprep.mubr.f32.mxu0 0.0
    %859 = vmatmul.mubr.f32.gmra.mrb[0].mxu0 %v556
    %v860 = vpop.f32.mrb[0].mxu0
    %v861 = vadd.f32 %v716, %v860
    %v862 = vpop.f32.mrb[0].mxu0
    %863 = vmatprep.mubr.f32.mxu0 0.0
    %864 = vmatmul.mubr.f32.gmra.mrb[0].mxu0 %v557
    %v865 = vpop.f32.mrb[0].mxu0
    %v866 = vadd.f32 %v721, %v865
    %v867 = vpop.f32.mrb[0].mxu0
    %868 = vmatprep.mubr.f32.mxu0 0.0
    %869 = vmatmul.mubr.f32.gmra.mrb[0].mxu0 %v558
    %v870 = vpop.f32.mrb[0].mxu0
    %v871 = vadd.f32 %v726, %v870
    %v872 = vpop.f32.mrb[0].mxu0
    %873 = vmatprep.mubr.f32.mxu0 0.0
    %874 = vmatmul.mubr.f32.gmra.mrb[0].mxu0 %v559
    %v875 = vpop.f32.mrb[0].mxu0
    %v876 = vadd.f32 %v731, %v875
    %v877 = vpop.f32.mrb[0].mxu0
    %878 = vmatprep.mubr.f32.mxu0 0.0
    %879 = vmatmul.mubr.f32.gmra.mrb[0].mxu0 %v560
    %v880 = vpop.f32.mrb[0].mxu0
    %v881 = vadd.f32 %v736, %v880
    %v882 = vpop.f32.mrb[0].mxu0
    %883 = vmatprep.mubr.f32.mxu0 0.0
    %884 = vmatmul.mubr.f32.gmra.mrb[0].mxu0 %v561
    %v885 = vpop.f32.mrb[0].mxu0
    %v886 = vadd.f32 %v741, %v885
    %v887 = vpop.f32.mrb[0].mxu0
    %888 = vmatprep.mubr.f32.mxu0 0.0
    %889 = vmatmul.mubr.f32.gmra.mrb[0].mxu0 %v562
    %v890 = vpop.f32.mrb[0].mxu0
    %v891 = vadd.f32 %v746, %v890
    %v892 = vpop.f32.mrb[0].mxu0
    %893 = vmatprep.mubr.f32.mxu0 0.0
    %894 = vmatmul.mubr.f32.gmra.mrb[0].mxu0 %v563
    %v895 = vpop.f32.mrb[0].mxu0
    %v896 = vadd.f32 %v751, %v895
    %v897 = vpop.f32.mrb[0].mxu0
    %898 = vmatprep.mubr.f32.mxu0 0.0
    %899 = vmatmul.mubr.f32.gmra.mrb[0].mxu0 0.0
    %v900 = vpop.f32.mrb[0].mxu0
    %v901 = vadd.f32 %v756, %v900
    %v902 = vpop.f32.mrb[0].mxu0
    %903 = vmatprep.mubr.f32.mxu0 0.0
    %904 = vmatmul.mubr.f32.gmra.mrb[0].mxu0 0.0
    %v905 = vpop.f32.mrb[0].mxu0
    %v906 = vadd.f32 %v761, %v905
    %v907 = vpop.f32.mrb[0].mxu0
    %908 = vdwg.mxu0
    %v909 = vmax.f32 %v831, 0.0
    %v910 = vmax.f32 %v836, 0.0
    %v911 = vmax.f32 %v841, 0.0
    %v912 = vmax.f32 %v846, 0.0
    %v913 = vmax.f32 %v851, 0.0
    %v914 = vmax.f32 %v856, 0.0
    %v915 = vmax.f32 %v861, 0.0
    %v916 = vmax.f32 %v866, 0.0
    %v917 = vmax.f32 %v871, 0.0
    %v918 = vmax.f32 %v876, 0.0
    %v919 = vmax.f32 %v881, 0.0
    %v920 = vmax.f32 %v886, 0.0
    %v921 = vmax.f32 %v891, 0.0
    %v922 = vmax.f32 %v896, 0.0
    %v923 = vmax.f32 %v901, 0.0
    %v924 = vmax.f32 %v906, 0.0
    %v925 = vmax.f32 %v909, %v911
    %v926 = vmax.f32 %v910, %v912
    %v927 = vmax.f32 %v913, %v915
    %v928 = vmax.f32 %v914, %v916
    %v929 = vmax.f32 %v917, %v919
    %v930 = vmax.f32 %v918, %v920
    %v931 = vmax.f32 %v921, %v923
    %v932 = vmax.f32 %v922, %v924
    %v933 = vld [vmem:[#allocation5] sm:$0xff]
    %v934 = vld [vmem:[#allocation5 + $0x8] sm:$0xff]
    %v935 = vld [vmem:[#allocation5 + $0x10] sm:$0xff]
    %v936 = vld [vmem:[#allocation5 + $0x18] sm:$0xff]
    %v937 = vld [vmem:[#allocation5 + $0x20] sm:$0xff]
    %v938 = vld [vmem:[#allocation5 + $0x28] sm:$0xff]
    %v939 = vld [vmem:[#allocation5 + $0x30] sm:$0xff]
    %v940 = vld [vmem:[#allocation5 + $0x38] sm:$0xff]
    %v941 = vld [vmem:[#allocation5 + $0x40] sm:$0xff]
    %v942 = vld [vmem:[#allocation5 + $0x48] sm:$0xff]
    %v943 = vld [vmem:[#allocation5 + $0x50] sm:$0xff]
    %v944 = vld [vmem:[#allocation5 + $0x58] sm:$0xff]
    %v945 = vld [vmem:[#allocation5 + $0x60] sm:$0xff]
    %v946 = vld [vmem:[#allocation5 + $0x68] sm:$0xff]
    %v947 = vld [vmem:[#allocation5 + $0x70] sm:$0xff]
    %v948 = vld [vmem:[#allocation5 + $0x78] sm:$0xff]
    %v949 = vld [vmem:[#allocation5 + $0x80] sm:$0xff]
    %v950 = vld [vmem:[#allocation5 + $0x88] sm:$0xff]
    %v951 = vld [vmem:[#allocation5 + $0x90] sm:$0xff]
    %v952 = vld [vmem:[#allocation5 + $0x98] sm:$0xff]
    %v953 = vld [vmem:[#allocation5 + $0xa0] sm:$0xff]
    %v954 = vld [vmem:[#allocation5 + $0xa8] sm:$0xff]
    %v955 = vld [vmem:[#allocation5 + $0xb0] sm:$0xff]
    %v956 = vld [vmem:[#allocation5 + $0xb8] sm:$0xff]
    %v957 = vld [vmem:[#allocation5 + $0xc0] sm:$0xff]
    %v958 = vld [vmem:[#allocation5 + $0xc8] sm:$0xff]
    %v959 = vld [vmem:[#allocation5 + $0xd0] sm:$0xff]
    %v960 = vld [vmem:[#allocation5 + $0xd8] sm:$0xff]
    %v961 = vld [vmem:[#allocation5 + $0xe0] sm:$0xff]
    %v962 = vld [vmem:[#allocation5 + $0xe8] sm:$0xff]
    %v963 = vld [vmem:[#allocation5 + $0xf0] sm:$0xff]
    %v964 = vld [vmem:[#allocation5 + $0xf8] sm:$0xff]
    %v965 = vld [vmem:[#allocation5 + $0x100] sm:$0xff]
    %v966 = vld [vmem:[#allocation5 + $0x108] sm:$0xff]
    %v967 = vld [vmem:[#allocation5 + $0x110] sm:$0xff]
    %v968 = vld [vmem:[#allocation5 + $0x118] sm:$0xff]
    %v969 = vld [vmem:[#allocation5 + $0x120] sm:$0xff]
    %v970 = vld [vmem:[#allocation5 + $0x128] sm:$0xff]
    %v971 = vld [vmem:[#allocation5 + $0x130] sm:$0xff]
    %v972 = vld [vmem:[#allocation5 + $0x138] sm:$0xff]
    %v973 = vld [vmem:[#allocation5 + $0x140] sm:$0xff]
    %v974 = vld [vmem:[#allocation5 + $0x148] sm:$0xff]
    %v975 = vld [vmem:[#allocation5 + $0x150] sm:$0xff]
    %v976 = vld [vmem:[#allocation5 + $0x158] sm:$0xff]
    %v977 = vld [vmem:[#allocation5 + $0x160] sm:$0xff]
    %v978 = vld [vmem:[#allocation5 + $0x168] sm:$0xff]
    %v979 = vld [vmem:[#allocation5 + $0x170] sm:$0xff]
    %v980 = vld [vmem:[#allocation5 + $0x178] sm:$0xff]
    %v981 = vld [vmem:[#allocation5 + $0x180] sm:$0xff]
    %v982 = vld [vmem:[#allocation5 + $0x188] sm:$0xff]
    %v983 = vld [vmem:[#allocation5 + $0x190] sm:$0xff]
    %v984 = vld [vmem:[#allocation5 + $0x198] sm:$0xff]
    %v985 = vld [vmem:[#allocation5 + $0x1a0] sm:$0xff]
    %v986 = vld [vmem:[#allocation5 + $0x1a8] sm:$0xff]
    %v987 = vld [vmem:[#allocation5 + $0x1b0] sm:$0xff]
    %v988 = vld [vmem:[#allocation5 + $0x1b8] sm:$0xff]
    %v989 = vld [vmem:[#allocation5 + $0x1c0] sm:$0xff]
    %v990 = vld [vmem:[#allocation5 + $0x1c8] sm:$0xff]
    %v991 = vld [vmem:[#allocation5 + $0x1d0] sm:$0xff]
    %v992 = vld [vmem:[#allocation5 + $0x1d8] sm:$0xff]
    %v993 = vld [vmem:[#allocation5 + $0x1e0] sm:$0xff]
    %v994 = vld [vmem:[#allocation5 + $0x1e8] sm:$0xff]
    %v995 = vld [vmem:[#allocation5 + $0x1f0] sm:$0xff]
    %v996 = vld [vmem:[#allocation5 + $0x1f8] sm:$0xff]
    %v997 = vld [vmem:[%s6] sm:$0x1]
    %v999 = vlaneseq
    %v1000 = vshrl.u32 %v999, 7
    %v1001 = vsub.s32 0, %v1000
    %v1002 = vrot.slane %v997, %v1001
    %1004 = vmatprep.subr.mxu0 0.0
    %1005 = vmatpush1.msra.mxu0 %v933
    %1006 = vmatprep.subr.mxu0 0.0
    %1007 = vmatpush1.msra.mxu0 %v934
    %1008 = vmatprep.subr.mxu0 0.0
    %1009 = vmatpush1.msra.mxu0 %v935
    %1010 = vmatprep.subr.mxu0 0.0
    %1011 = vmatpush1.msra.mxu0 %v936
    %1012 = vmatprep.subr.mxu0 0.0
    %1013 = vmatpush1.msra.mxu0 %v937
    %1014 = vmatprep.subr.mxu0 0.0
    %1015 = vmatpush1.msra.mxu0 %v938
    %1016 = vmatprep.subr.mxu0 0.0
    %1017 = vmatpush1.msra.mxu0 %v939
    %1018 = vmatprep.subr.mxu0 0.0
    %1019 = vmatpush1.msra.mxu0 %v940
    %1020 = vmatprep.subr.mxu0 0.0
    %1021 = vmatpush1.msra.mxu0 %v941
    %1022 = vmatprep.subr.mxu0 0.0
    %1023 = vmatpush1.msra.mxu0 %v942
    %1024 = vmatprep.subr.mxu0 0.0
    %1025 = vmatpush1.msra.mxu0 %v943
    %1026 = vmatprep.subr.mxu0 0.0
    %1027 = vmatpush1.msra.mxu0 %v944
    %1028 = vmatprep.subr.mxu0 0.0
    %1029 = vmatpush1.msra.mxu0 %v945
    %1030 = vmatprep.subr.mxu0 0.0
    %1031 = vmatpush1.msra.mxu0 %v946
    %1032 = vmatprep.subr.mxu0 0.0
    %1033 = vmatpush1.msra.mxu0 %v947
    %1034 = vmatprep.subr.mxu0 0.0
    %1035 = vmatpush1.msra.mxu0 %v948
    %1036 = vmatprep.subr.mxu0 0.0
    %1037 = vmatpush1.msra.mxu0 %v949
    %1038 = vmatprep.subr.mxu0 0.0
    %1039 = vmatpush1.msra.mxu0 %v950
    %1040 = vmatprep.subr.mxu0 0.0
    %1041 = vmatpush1.msra.mxu0 %v951
    %1042 = vmatprep.subr.mxu0 0.0
    %1043 = vmatpush1.msra.mxu0 %v952
    %1044 = vmatprep.subr.mxu0 0.0
    %1045 = vmatpush1.msra.mxu0 %v953
    %1046 = vmatprep.subr.mxu0 0.0
    %1047 = vmatpush1.msra.mxu0 %v954
    %1048 = vmatprep.subr.mxu0 0.0
    %1049 = vmatpush1.msra.mxu0 %v955
    %1050 = vmatprep.subr.mxu0 0.0
    %1051 = vmatpush1.msra.mxu0 %v956
    %1052 = vmatprep.subr.mxu0 0.0
    %1053 = vmatpush1.msra.mxu0 %v957
    %1054 = vmatprep.subr.mxu0 0.0
    %1055 = vmatpush1.msra.mxu0 %v958
    %1056 = vmatprep.subr.mxu0 0.0
    %1057 = vmatpush1.msra.mxu0 %v959
    %1058 = vmatprep.subr.mxu0 0.0
    %1059 = vmatpush1.msra.mxu0 %v960
    %1060 = vmatprep.subr.mxu0 0.0
    %1061 = vmatpush1.msra.mxu0 %v961
    %1062 = vmatprep.subr.mxu0 0.0
    %1063 = vmatpush1.msra.mxu0 %v962
    %1064 = vmatprep.subr.mxu0 0.0
    %1065 = vmatpush1.msra.mxu0 %v963
    %1066 = vmatprep.subr.mxu0 0.0
    %1067 = vmatpush1.msra.mxu0 %v964
    %1068 = vmatprep.mubr.f32.mxu0 %v927
    %1069 = vmatmul.mubr.f32.gmra.mrb[0].mxu0 %v925
    %v1070 = vpop.f32.mrb[0].mxu0
    %v1071 = vadd.f32 %v1002, %v1070
    %v1072 = vpop.f32.mrb[0].mxu0
    %1073 = vmatprep.mubr.f32.mxu0 %v928
    %1074 = vmatmul.mubr.f32.gmra.mrb[0].mxu0 %v926
    %v1075 = vpop.f32.mrb[0].mxu0
    %v1076 = vadd.f32 %v1002, %v1075
    %v1077 = vpop.f32.mrb[0].mxu0
    %1078 = vdwg.mxu0
    %1079 = vmatprep.subr.mxu0 0.0
    %1080 = vmatpush1.msra.mxu0 %v965
    %1081 = vmatprep.subr.mxu0 0.0
    %1082 = vmatpush1.msra.mxu0 %v966
    %1083 = vmatprep.subr.mxu0 0.0
    %1084 = vmatpush1.msra.mxu0 %v967
    %1085 = vmatprep.subr.mxu0 0.0
    %1086 = vmatpush1.msra.mxu0 %v968
    %1087 = vmatprep.subr.mxu0 0.0
    %1088 = vmatpush1.msra.mxu0 %v969
    %1089 = vmatprep.subr.mxu0 0.0
    %1090 = vmatpush1.msra.mxu0 %v970
    %1091 = vmatprep.subr.mxu0 0.0
    %1092 = vmatpush1.msra.mxu0 %v971
    %1093 = vmatprep.subr.mxu0 0.0
    %1094 = vmatpush1.msra.mxu0 %v972
    %1095 = vmatprep.subr.mxu0 0.0
    %1096 = vmatpush1.msra.mxu0 %v973
    %1097 = vmatprep.subr.mxu0 0.0
    %1098 = vmatpush1.msra.mxu0 %v974
    %1099 = vmatprep.subr.mxu0 0.0
    %1100 = vmatpush1.msra.mxu0 %v975
    %1101 = vmatprep.subr.mxu0 0.0
    %1102 = vmatpush1.msra.mxu0 %v976
    %1103 = vmatprep.subr.mxu0 0.0
    %1104 = vmatpush1.msra.mxu0 %v977
    %1105 = vmatprep.subr.mxu0 0.0
    %1106 = vmatpush1.msra.mxu0 %v978
    %1107 = vmatprep.subr.mxu0 0.0
    %1108 = vmatpush1.msra.mxu0 %v979
    %1109 = vmatprep.subr.mxu0 0.0
    %1110 = vmatpush1.msra.mxu0 %v980
    %1111 = vmatprep.subr.mxu0 0.0
    %1112 = vmatpush1.msra.mxu0 %v981
    %1113 = vmatprep.subr.mxu0 0.0
    %1114 = vmatpush1.msra.mxu0 %v982
    %1115 = vmatprep.subr.mxu0 0.0
    %1116 = vmatpush1.msra.mxu0 %v983
    %1117 = vmatprep.subr.mxu0 0.0
    %1118 = vmatpush1.msra.mxu0 %v984
    %1119 = vmatprep.subr.mxu0 0.0
    %1120 = vmatpush1.msra.mxu0 %v985
    %1121 = vmatprep.subr.mxu0 0.0
    %1122 = vmatpush1.msra.mxu0 %v986
    %1123 = vmatprep.subr.mxu0 0.0
    %1124 = vmatpush1.msra.mxu0 %v987
    %1125 = vmatprep.subr.mxu0 0.0
    %1126 = vmatpush1.msra.mxu0 %v988
    %1127 = vmatprep.subr.mxu0 0.0
    %1128 = vmatpush1.msra.mxu0 %v989
    %1129 = vmatprep.subr.mxu0 0.0
    %1130 = vmatpush1.msra.mxu0 %v990
    %1131 = vmatprep.subr.mxu0 0.0
    %1132 = vmatpush1.msra.mxu0 %v991
    %1133 = vmatprep.subr.mxu0 0.0
    %1134 = vmatpush1.msra.mxu0 %v992
    %1135 = vmatprep.subr.mxu0 0.0
    %1136 = vmatpush1.msra.mxu0 %v993
    %1137 = vmatprep.subr.mxu0 0.0
    %1138 = vmatpush1.msra.mxu0 %v994
    %1139 = vmatprep.subr.mxu0 0.0
    %1140 = vmatpush1.msra.mxu0 %v995
    %1141 = vmatprep.subr.mxu0 0.0
    %1142 = vmatpush1.msra.mxu0 %v996
    %1143 = vmatprep.mubr.f32.mxu0 %v931
    %1144 = vmatmul.mubr.f32.gmra.mrb[0].mxu0 %v929
    %v1145 = vpop.f32.mrb[0].mxu0
    %v1146 = vadd.f32 %v1071, %v1145
    %v1147 = vpop.f32.mrb[0].mxu0
    %1148 = vmatprep.mubr.f32.mxu0 %v932
    %1149 = vmatmul.mubr.f32.gmra.mrb[0].mxu0 %v930
    %v1150 = vpop.f32.mrb[0].mxu0
    %v1151 = vadd.f32 %v1076, %v1150
    %v1152 = vpop.f32.mrb[0].mxu0
    %1153 = vdwg.mxu0
    %1154 = vst [vmem:[#allocation7] sm:$0xff] %v1146
    %1155 = vst [vmem:[#allocation7 + $0x8] sm:$0xff] %v1151
    // Predicated region
    $region38: #{tpu_custom_call.1} parent=1 // pred_check
      _
    $region39: #{tpu_custom_call.1} parent=1 // pred_check_branch
      %1157 = sbr.rel (0) target = $region41
    $region40: #{tpu_custom_call.1} parent=1 // pred_region
      %s1159 = ssub.s32 256, 256
      %1160 = vsyncadd [#allocation4], %s1159
      %s1161 = sshll.u32 [#allocation7], 4
      %s1162 = int_to_ptr.vmem [resolvable:$true] %s1161
      %1167 = dma.vmem_to_hbm [thread:$0]  %s1162, 256, %s7, [#allocation4], 128, 128, 8
    $region41: #{tpu_custom_call.1} parent=1 // pred_fallthru
      _
    // Predicated region
    $region42: #{tpu_custom_call.1} parent=1 // pred_check
      _
    $region43: #{tpu_custom_call.1} parent=1 // pred_check_branch
      %1169 = sbr.rel (0) target = $region45
    $region44: #{tpu_custom_call.1} parent=1 // pred_region
      %1170 = dma.done [#allocation4], 256
    $region45: #{tpu_custom_call.1} parent=1 // pred_fallthru
      _
    %1171 = vsyncpa [#allocation3], 1
    %1172 = vsyncpa [#allocation6], 1
    %1173 = vsyncpa [#allocation4], 1

</llo_original>
